<compile_context>
chip_gen: v7x
topology: tpu7x:2x2x1
jax: 0.10.0
libtpu: 0.0.40
codegen_flags: <defaults>
</compile_context>

<pallas_src>
import jax
import jax.numpy as jnp
from jax.experimental import pallas as pl
from jax.experimental.pallas import tpu as pltpu


def _round_up(a, m):
    return ((a + m - 1) // m) * m


def _mlp_kernel(params_ref, x_ref, o_ref):
    # x_ref: (2, R, 128)  -- batch dense on sublanes (R) x lanes (128).
    # params_ref: (9,) f32 in SMEM:
    #   [w1_00, w1_01, w1_10, w1_11, b1_0, b1_1, w2_00, w2_01, b2_0]
    # o_ref: (R, 128)
    x0 = x_ref[0].astype(jnp.float32)   # (R, 128)
    x1 = x_ref[1].astype(jnp.float32)   # (R, 128)

    w1_00 = params_ref[0]
    w1_01 = params_ref[1]
    w1_10 = params_ref[2]
    w1_11 = params_ref[3]
    b1_0 = params_ref[4]
    b1_1 = params_ref[5]
    w2_00 = params_ref[6]
    w2_01 = params_ref[7]
    b2_0 = params_ref[8]

    # linear1 + ReLU  (pure VPU broadcast-fmas, fully dense vregs)
    h0 = jnp.maximum(x0 * w1_00 + x1 * w1_01 + b1_0, 0.0)
    h1 = jnp.maximum(x0 * w1_10 + x1 * w1_11 + b1_1, 0.0)
    # linear2
    y = h0 * w2_00 + h1 * w2_01 + b2_0   # (R, 128)

    o_ref[...] = y.astype(o_ref.dtype)


def simplenet_forward(x, w1, b1, w2, b2, *, tile_batch=131072):
    """SimpleNet forward: Linear(2,2) -> ReLU -> Linear(2,1).

    x:  (B, 2) activations
    w1: (2, 2)  PyTorch layout (out_features, in_features)
    b1: (2,)
    w2: (1, 2)
    b2: (1,)
    returns: (B, 1)
    """
    B = x.shape[0]
    out_dtype = x.dtype

    # One packed parameter buffer -> single SMEM operand (one DMA instead of four).
    # (Hoist this out of the per-call path / under jit if the weights are reused.)
    params = jnp.concatenate(
        [w1.reshape(-1), b1.reshape(-1), w2.reshape(-1), b2.reshape(-1)]
    ).astype(jnp.float32)                                       # (9,)

    # Batch laid out as rows of 128 lanes; rows are sublane-aligned (multiple of 8).
    rows = _round_up(pl.cdiv(B, 128), 8)
    tile_rows = max(8, _round_up(tile_batch, 1024) // 128)      # rows per grid step
    tile_rows = min(tile_rows, rows)
    # Prefer >= 2 parallel tiles (dual TensorCore on v7x) when there is enough work.
    if rows >= 16 and rows <= tile_rows:
        tile_rows = _round_up(rows // 2, 8)
    rows_p = _round_up(rows, tile_rows)
    bp = rows_p * 128

    # Feature-major, batch-dense layout: (2, rows_p, 128).
    # TODO(synk): the x.T + pad is one extra XLA HBM pass; a producer-supplied
    # feature-major x (or input fusion) would remove it entirely.
    xt = jnp.pad(x.T, ((0, 0), (0, bp - B))).reshape(2, rows_p, 128)

    grid = (rows_p // tile_rows,)

    cost = pl.CostEstimate(
        flops=14 * bp,                       # 6 mul + 6 add + 2 max per element
        transcendentals=0,
        bytes_accessed=3 * bp * 4 + 9 * 4,   # 8 B/elem in + 4 B/elem out + params
    )

    out = pl.pallas_call(
        _mlp_kernel,
        out_shape=jax.ShapeDtypeStruct((rows_p, 128), out_dtype),
        grid=grid,
        in_specs=[
            pl.BlockSpec(memory_space=pltpu.MemorySpace.SMEM),       # packed params
            pl.BlockSpec((2, tile_rows, 128), lambda i: (0, i, 0)),  # x tile
        ],
        out_specs=pl.BlockSpec((tile_rows, 128), lambda i: (i, 0)),  # y tile
        compiler_params=pltpu.CompilerParams(
            dimension_semantics=("parallel",),                       # shard batch tiles
        ),
        cost_estimate=cost,
    )(params, xt)

    # Free epilogue: row-major flatten is exactly batch order; padded garbage
    # (bias -> ReLU -> bias on zero columns) is sliced off here.
    return out.reshape(-1)[:B].reshape(B, 1)


def init_params(key):
    """PyTorch nn.Linear default init: U(-1/sqrt(fan_in), 1/sqrt(fan_in)).

    Weights kept in PyTorch (out_features, in_features) layout.
    """
    k1, k2, k3, k4 = jax.random.split(key, 4)
    bound = 1.0 / jnp.sqrt(2.0)  # fan_in = 2 for both layers
    w1 = jax.random.uniform(k1, (2, 2), jnp.float32, -bound, bound)
    b1 = jax.random.uniform(k2, (2,), jnp.float32, -bound, bound)
    w2 = jax.random.uniform(k3, (1, 2), jnp.float32, -bound, bound)
    b2 = jax.random.uniform(k4, (1,), jnp.float32, -bound, bound)
    return w1, b1, w2, b2


if __name__ == "__main__":
    key = jax.random.PRNGKey(0)
    k_x, k_p = jax.random.split(key)

    B = 8  # small batch
    x = jax.random.normal(k_x, (B, 2), jnp.float32)
    w1, b1, w2, b2 = init_params(k_p)

    out = simplenet_forward(x, w1, b1, w2, b2)
    out = jax.block_until_ready(out)

    # Reference check in plain JAX (same math as the PyTorch forward).
    ref = jnp.maximum(x @ w1.T + b1, 0.0) @ w2.T + b2
    assert out.shape == (B, 1)
    assert jnp.allclose(out, ref, atol=1e-5, rtol=1e-5)

    print("KERNEL_OK")
</pallas_src>

<mosaic_0001>
module attributes {stable_mosaic.version = 11 : i64} {
  func.func @_mlp_kernel(%arg0: i32, %arg1: memref<9xf32, #tpu.memory_space<smem>>, %arg2: memref<2x8x128xf32, #tpu.memory_space<vmem>>, %arg3: memref<8x128xf32, #tpu.memory_space<vmem>>) attributes {dimension_semantics = [#tpu.dimension_semantics<parallel>], iteration_bounds = array<i64: 1>, scalar_prefetch = 0 : i64, scratch_operands = 0 : i64, tpu.core_type = #tpu.core_type<tc>, window_params = [{transform_indices = @transform_0, window_bounds = array<i64: 9>}, {transform_indices = @transform_1, window_bounds = array<i64: 2, 8, 128>}, {transform_indices = @transform_2, window_bounds = array<i64: 8, 128>}]} {
    %c0 = arith.constant 0 : index
    %c0_0 = arith.constant 0 : index
    %c0_1 = arith.constant 0 : index
    %0 = vector.load %arg2[%c0, %c0_0, %c0_1] : memref<2x8x128xf32, #tpu.memory_space<vmem>>, vector<1x8x128xf32>
    %1 = vector.shape_cast %0 : vector<1x8x128xf32> to vector<8x128xf32>
    %c1 = arith.constant 1 : index
    %c0_2 = arith.constant 0 : index
    %c0_3 = arith.constant 0 : index
    %2 = vector.load %arg2[%c1, %c0_2, %c0_3] : memref<2x8x128xf32, #tpu.memory_space<vmem>>, vector<1x8x128xf32>
    %3 = vector.shape_cast %2 : vector<1x8x128xf32> to vector<8x128xf32>
    %c0_4 = arith.constant 0 : index
    %4 = memref.load %arg1[%c0_4] : memref<9xf32, #tpu.memory_space<smem>>
    %c1_5 = arith.constant 1 : index
    %5 = memref.load %arg1[%c1_5] : memref<9xf32, #tpu.memory_space<smem>>
    %c2 = arith.constant 2 : index
    %6 = memref.load %arg1[%c2] : memref<9xf32, #tpu.memory_space<smem>>
    %c3 = arith.constant 3 : index
    %7 = memref.load %arg1[%c3] : memref<9xf32, #tpu.memory_space<smem>>
    %c4 = arith.constant 4 : index
    %8 = memref.load %arg1[%c4] : memref<9xf32, #tpu.memory_space<smem>>
    %c5 = arith.constant 5 : index
    %9 = memref.load %arg1[%c5] : memref<9xf32, #tpu.memory_space<smem>>
    %c6 = arith.constant 6 : index
    %10 = memref.load %arg1[%c6] : memref<9xf32, #tpu.memory_space<smem>>
    %c7 = arith.constant 7 : index
    %11 = memref.load %arg1[%c7] : memref<9xf32, #tpu.memory_space<smem>>
    %c8 = arith.constant 8 : index
    %12 = memref.load %arg1[%c8] : memref<9xf32, #tpu.memory_space<smem>>
    %13 = vector.broadcast %4 : f32 to vector<8x128xf32>
    %14 = arith.mulf %1, %13 : vector<8x128xf32>
    %15 = vector.broadcast %5 : f32 to vector<8x128xf32>
    %16 = arith.mulf %3, %15 : vector<8x128xf32>
    %17 = arith.addf %14, %16 : vector<8x128xf32>
    %18 = vector.broadcast %8 : f32 to vector<8x128xf32>
    %19 = arith.addf %17, %18 : vector<8x128xf32>
    %cst = arith.constant 0.000000e+00 : f32
    %20 = vector.broadcast %cst : f32 to vector<8x128xf32>
    %21 = arith.maximumf %19, %20 : vector<8x128xf32>
    %22 = vector.broadcast %6 : f32 to vector<8x128xf32>
    %23 = arith.mulf %1, %22 : vector<8x128xf32>
    %24 = vector.broadcast %7 : f32 to vector<8x128xf32>
    %25 = arith.mulf %3, %24 : vector<8x128xf32>
    %26 = arith.addf %23, %25 : vector<8x128xf32>
    %27 = vector.broadcast %9 : f32 to vector<8x128xf32>
    %28 = arith.addf %26, %27 : vector<8x128xf32>
    %cst_6 = arith.constant 0.000000e+00 : f32
    %29 = vector.broadcast %cst_6 : f32 to vector<8x128xf32>
    %30 = arith.maximumf %28, %29 : vector<8x128xf32>
    %31 = vector.broadcast %10 : f32 to vector<8x128xf32>
    %32 = arith.mulf %21, %31 : vector<8x128xf32>
    %33 = vector.broadcast %11 : f32 to vector<8x128xf32>
    %34 = arith.mulf %30, %33 : vector<8x128xf32>
    %35 = arith.addf %32, %34 : vector<8x128xf32>
    %36 = vector.broadcast %12 : f32 to vector<8x128xf32>
    %37 = arith.addf %35, %36 : vector<8x128xf32>
    %c0_7 = arith.constant 0 : index
    %c0_8 = arith.constant 0 : index
    %38 = vector.load %arg3[%c0_7, %c0_8] : memref<8x128xf32, #tpu.memory_space<vmem>>, vector<8x128xf32>
    tpu.vector_store %arg3[%c0_7, %c0_8], %37 {strides = array<i32>} : memref<8x128xf32, #tpu.memory_space<vmem>>, vector<8x128xf32>,
    return
  }
  func.func @transform_0(%arg0: i32) -> i32 {
    %c0_i32 = arith.constant 0 : i32
    %c0_i32_0 = arith.constant 0 : i32
    return %c0_i32 : i32
  }
  func.func @transform_1(%arg0: i32) -> (i32, i32, i32) {
    %c0_i32 = arith.constant 0 : i32
    %c0_i32_0 = arith.constant 0 : i32
    %c0_i32_1 = arith.constant 0 : i32
    return %c0_i32, %arg0, %c0_i32_0 : i32, i32, i32
  }
  func.func @transform_2(%arg0: i32) -> (i32, i32) {
    %c0_i32 = arith.constant 0 : i32
    %c0_i32_0 = arith.constant 0 : i32
    return %arg0, %c0_i32 : i32, i32
  }
}

</mosaic_0001>

<llo_original>
// kernel: tpu_custom_call.1
$region0: #{tpu_custom_call.1}
  #allocation0 [shape = 'u32[]', space=smem, size = 0x4, offset = 0x4, fixed_abs, tag = 'smem constant byte address 0x4 - core index']
  #allocation1 [shape = 'u32[144,128]{1,0:T(1,128)}', space=vmem, size = 0x12000, scoped, tag = 'internal scratch']
  %s0 = inlined_call_operand.hbm [shape: f32[9], index: 0, kind: input, shape index: {}]
  %s1 = inlined_call_operand.hbm [shape: f32[2,8,128], index: 1, kind: input, shape index: {}]
  %s2 = inlined_call_operand.hbm [shape: f32[8,128], index: 2, kind: output, shape index: {}]
  %s3 = sld [smem:[#allocation0]]
  $region26: #{tpu_custom_call.1} parent=0
    _
  %s5 = ssub.s32 1, %s3
  %s6 = scalar_select 0, %s5, %s3
  $region1: #{tpu_custom_call.1} parent=0
    #allocation2 [shape = 'u8[512]{0}', space=smem, size = 0x200, scoped, tag = 'input window, operand 0, single buffered']
    #allocation3 [shape = 's32[1]{0}', space=sflag, size = 0x4, scoped, tag = 'scoped memory for tpu_custom_call.1']
    #allocation4 [shape = 's32[1]{0}', space=sflag, size = 0x4, scoped, tag = 'scoped memory for tpu_custom_call.1']
    #allocation5 [shape = 's32[1]{0}', space=sflag, size = 0x4, scoped, tag = 'scoped memory for tpu_custom_call.1']
    #allocation6 [shape = 'u8[8192]{0}', space=vmem, size = 0x2000, scoped, tag = 'input window, operand 1, single buffered']
    #allocation7 [shape = 'u8[4096]{0}', space=vmem, size = 0x1000, scoped, tag = 'output window, operand 0, single buffered']
    %7 = vsyncpa [#allocation5], 0
    %8 = vsyncpa [#allocation3], 0
    %9 = vsyncpa [#allocation4], 0
    // Predicated region
    $region2: #{tpu_custom_call.1} parent=1 // pred_check
      _
    $region3: #{tpu_custom_call.1} parent=1 // pred_check_branch
      %11 = sbr.rel (0) target = $region5
    $region4: #{tpu_custom_call.1} parent=1 // pred_region
      %s13 = ssub.s32 16, 16
      %14 = vsyncadd [#allocation5], %s13
      %17 = dma.hbm_to_smem %s0, 16, [#allocation2], [#allocation5]
    $region5: #{tpu_custom_call.1} parent=1 // pred_fallthru
      _
    // Predicated region
    $region6: #{tpu_custom_call.1} parent=1 // pred_check
      _
    $region7: #{tpu_custom_call.1} parent=1 // pred_check_branch
      %19 = sbr.rel (0) target = $region9
    $region8: #{tpu_custom_call.1} parent=1 // pred_region
      %s21 = ssub.s32 256, 256
      %22 = vsyncadd [#allocation3], %s21
      %s23 = sshll.u32 [#allocation6], 4
      %s24 = int_to_ptr.vmem [resolvable:$true] %s23
      %29 = dma.hbm_to_vmem [thread:$0]  %s1, 256, %s24, [#allocation3], 128, 128, 8
    $region9: #{tpu_custom_call.1} parent=1 // pred_fallthru
      _
    // Predicated region
    $region10: #{tpu_custom_call.1} parent=1 // pred_check
      _
    $region11: #{tpu_custom_call.1} parent=1 // pred_check_branch
      %31 = sbr.rel (0) target = $region13
    $region12: #{tpu_custom_call.1} parent=1 // pred_region
      %32 = dma.done [#allocation5], 16
    $region13: #{tpu_custom_call.1} parent=1 // pred_fallthru
      _
    // Predicated region
    $region14: #{tpu_custom_call.1} parent=1 // pred_check
      _
    $region15: #{tpu_custom_call.1} parent=1 // pred_check_branch
      %34 = sbr.rel (0) target = $region17
    $region16: #{tpu_custom_call.1} parent=1 // pred_region
      %35 = dma.done [#allocation3], 256
    $region17: #{tpu_custom_call.1} parent=1 // pred_fallthru
      _
    %36 = sfence
    %v37 = vld [vmem:[#allocation6] sm:$0xff]
    %s38 = scalar_lea.vmem [#allocation6], 8
    %v39 = vld [vmem:[%s38] sm:$0xff]
    %s40 = sld [smem:[#allocation2]]
    %s41 = sld [smem:[#allocation2 + $0x1]]
    %s42 = sld [smem:[#allocation2 + $0x2]]
    %s43 = sld [smem:[#allocation2 + $0x3]]
    %s44 = sld [smem:[#allocation2 + $0x4]]
    %s45 = sld [smem:[#allocation2 + $0x5]]
    %s46 = sld [smem:[#allocation2 + $0x6]]
    %s47 = sld [smem:[#allocation2 + $0x7]]
    %s48 = sld [smem:[#allocation2 + $0x8]]
    %v49 = vstv %s40
    %v50 = vmul.f32 %v37, %v49
    %v51 = vstv %s41
    %v52 = vmul.f32 %v39, %v51
    %v53 = vadd.f32 %v50, %v52
    %v54 = vstv %s44
    %v55 = vadd.f32 %v53, %v54
    %v56 = vmax.f32 %v55, 0.0
    %v57 = vstv %s42
    %v58 = vmul.f32 %v37, %v57
    %v59 = vstv %s43
    %v60 = vmul.f32 %v39, %v59
    %v61 = vadd.f32 %v58, %v60
    %v62 = vstv %s45
    %v63 = vadd.f32 %v61, %v62
    %v64 = vmax.f32 %v63, 0.0
    %v65 = vstv %s46
    %v66 = vmul.f32 %v56, %v65
    %v67 = vstv %s47
    %v68 = vmul.f32 %v64, %v67
    %v69 = vadd.f32 %v66, %v68
    %v70 = vstv %s48
    %v71 = vadd.f32 %v69, %v70
    %72 = vst [vmem:[#allocation7] sm:$0xff] %v71
    // Predicated region
    $region18: #{tpu_custom_call.1} parent=1 // pred_check
      _
    $region19: #{tpu_custom_call.1} parent=1 // pred_check_branch
      %74 = sbr.rel (0) target = $region21
    $region20: #{tpu_custom_call.1} parent=1 // pred_region
      %s76 = ssub.s32 128, 128
      %77 = vsyncadd [#allocation4], %s76
      %s79 = sshll.u32 [#allocation7], 4
      %s80 = int_to_ptr.vmem [resolvable:$true] %s79
      %82 = dma.vmem_to_hbm [thread:$0]  %s80, 128, %s2, [#allocation4]
    $region21: #{tpu_custom_call.1} parent=1 // pred_fallthru
      _
    // Predicated region
    $region22: #{tpu_custom_call.1} parent=1 // pred_check
      _
    $region23: #{tpu_custom_call.1} parent=1 // pred_check_branch
      %84 = sbr.rel (0) target = $region25
    $region24: #{tpu_custom_call.1} parent=1 // pred_region
      %85 = dma.done [#allocation4], 128
    $region25: #{tpu_custom_call.1} parent=1 // pred_fallthru
      _
    %86 = vsyncpa [#allocation3], 1
    %87 = vsyncpa [#allocation4], 1
    %88 = vsyncpa [#allocation5], 1

</llo_original>
